<compile_context>
chip_gen: v7x
topology: tpu7x:2x2x1
jax: 0.10.0
libtpu: 0.0.40
codegen_flags: <defaults>
</compile_context>

<pallas_src>
import functools

import jax
import jax.numpy as jnp
import numpy as np
from jax.experimental import pallas as pl
from jax.experimental.pallas import tpu as pltpu


def _round_up(x, m):
    return ((x + m - 1) // m) * m


def _class_risk_kernel(ck, n_chunks, beta_ref, scale_ref, pt_ref, w2_ref, out_ref):
    """One grid step: a [Cp, TB] block of P^T (classes on sublanes, batch on lanes).

    ck:       static k-chunk size for the pairwise compare (ck divides Cp).
    n_chunks: static number of chunks (Cp // ck).
    Output is a lane-dense [2, TB] block: row 0 = est_risk, row 1 = res.
    """
    beta = beta_ref[0]
    scale = scale_ref[0]

    PT = pt_ref[...]                               # [Cp, TB] f32
    Pj = PT[None, :, :]                            # [1, Cp, TB]

    def chunk_mass(chunk):                         # chunk: [ck, TB]
        Pk = chunk[:, None, :]                     # [ck, 1, TB]
        # mass of classes (in this chunk) strictly more probable than class j.
        # Leading-axis reduction -> pure VPU vreg adds, no XLU sublane reduce.
        return jnp.sum(jnp.where(Pk > Pj, Pk, 0.0), axis=0)   # [Cp, TB]

    if n_chunks == 1:
        higher = chunk_mass(PT)
    elif n_chunks <= 8:
        # trace-time unroll for short chunk counts.
        higher = chunk_mass(pt_ref[0:ck, :])
        for c in range(1, n_chunks):
            higher = higher + chunk_mass(pt_ref[c * ck:(c + 1) * ck, :])
    else:
        def body(c, acc):
            start = pl.multiple_of(c * ck, ck)
            return acc + chunk_mass(pt_ref[pl.ds(start, ck), :])

        higher = jax.lax.fori_loop(0, n_chunks, body, jnp.zeros_like(PT))

    # class j is OUTSIDE the top-beta coverage set iff the mass strictly
    # above it already reaches beta (matches ~mask with mask = higher < beta).
    contrib = jnp.where(higher >= beta, PT * w2_ref[...], 0.0)   # [Cp, TB]
    est = jnp.sqrt(jnp.sum(contrib, axis=0, keepdims=True))      # [1, TB]
    res = jnp.clip(est * scale, 0.0, 1.0)

    # single lane-dense store of both outputs.
    out_ref[...] = jnp.concatenate([est, res], axis=0)           # [2, TB]


def class_risk_regressor_forward(P, w, beta, scale, *, tb=None,
                                 vmem_budget=8 * 1024 * 1024):
    """Pallas forward for ClassRiskRegressor with learning=False.

    P:     [B, C] float32 probabilities
    w:     [C]    float32 per-class weights (TopBetaCoverage.torch_w)
    beta:  scalar float32
    scale: scalar float32 (the module's _scale parameter, init = 0.0)
    Returns (est_risk [B], res [B]);  `res` is the module's forward() output.
    """
    P = jnp.asarray(P, jnp.float32)
    w = jnp.asarray(w, jnp.float32)
    B, C = P.shape
    LANE, SUB = 128, 8

    # --- class (sublane) padding: only to the 8-row granule -----------------
    Cp = _round_up(C, SUB)

    # --- k-chunk size: largest divisor of Cp (multiple of 8) whose live
    #     compare/select temps (~2 x [ck, Cp, 128] f32) fit half the budget ---
    m = Cp // SUB
    divisors = sorted({SUB * d for d in range(1, m + 1) if m % d == 0},
                      reverse=True)
    ck = SUB
    for cand in divisors:
        if 2 * cand * Cp * LANE * 4 <= vmem_budget // 2:
            ck = cand
            break
    n_chunks = Cp // ck

    # --- batch (lane) tile: a divisor of the padded batch, budget-sized ------
    Bp = max(LANE, _round_up(B, LANE))
    n_groups = Bp // LANE
    if tb is None:
        per_lane_bytes = (2 * ck * Cp + 8 * Cp + 16) * 4
        cap = max(1, min(vmem_budget // (per_lane_bytes * LANE), 8, n_groups))
        divs_n = [dd for dd in range(1, n_groups + 1) if n_groups % dd == 0]
        d = max(dd for dd in divs_n if dd <= cap)
        # keep >= 2 grid steps when the batch allows it (v7x: 2 TCs/chip).
        if d == n_groups and n_groups >= 2:
            d = max(dd for dd in divs_n if dd < n_groups)
        tb = d * LANE
    assert tb % LANE == 0 and Bp % tb == 0

    # --- layout: batch on lanes -> P transposed & zero-padded to [Cp, Bp] ----
    # (padded classes have P=0 and w=0, padded batch columns are sliced off)
    PT = P.T
    if (Cp, Bp) != (C, B):
        PT = jnp.zeros((Cp, Bp), jnp.float32).at[:C, :B].set(PT)
    w2 = jnp.zeros((Cp, 1), jnp.float32).at[:C, 0].set(w * w)   # hoisted w^2
    beta_arr = jnp.asarray([beta], jnp.float32)
    scale_arr = jnp.asarray([scale], jnp.float32)

    vmem_limit = int(min(48 * 1024 * 1024,
                         max(32 * 1024 * 1024, vmem_budget + (8 << 20))))

    out = pl.pallas_call(
        functools.partial(_class_risk_kernel, ck, n_chunks),
        out_shape=jax.ShapeDtypeStruct((2, Bp), jnp.float32),
        grid=(Bp // tb,),
        in_specs=[
            pl.BlockSpec(memory_space=pltpu.MemorySpace.SMEM),   # beta
            pl.BlockSpec(memory_space=pltpu.MemorySpace.SMEM),   # scale
            pl.BlockSpec((Cp, tb), lambda i: (0, i)),            # P^T block
            pl.BlockSpec((Cp, 1), lambda i: (0, 0)),             # w^2 (replicated)
        ],
        out_specs=pl.BlockSpec((2, tb), lambda i: (0, i)),       # lane-dense
        compiler_params=pltpu.CompilerParams(
            dimension_semantics=("parallel",),
            vmem_limit_bytes=vmem_limit),
        cost_estimate=pl.CostEstimate(
            flops=3 * B * C * C + 5 * B * C,
            transcendentals=B,
            bytes_accessed=B * C * 4 + C * 4 + 2 * B * 4),
    )(beta_arr, scale_arr, PT, w2)

    est = out[0, :B]
    res = out[1, :B]
    return est, res


def _reference_forward(P, w, beta, scale):
    """Pure-JAX reference of the same semantics."""
    higher = jnp.sum(
        P[:, None, :] * (P[:, None, :] > P[:, :, None]).astype(P.dtype), axis=-1)
    mask = higher < beta
    est = jnp.sqrt(jnp.sum((~mask).astype(P.dtype) * P * (w ** 2)[None, :], axis=1))
    res = jnp.clip(est * scale, 0.0, 1.0)
    return est, res


if __name__ == "__main__":
    key = jax.random.PRNGKey(0)
    k1, k2, k3, k4 = jax.random.split(key, 4)

    # --- Test 1: module-default config (scale init = 0.0), small class count,
    #     batch big enough to exercise >=2 lane-tiles (grid of 2). ------------
    B1, C1 = 256, 16
    P1 = jax.nn.softmax(jax.random.normal(k1, (B1, C1), jnp.float32), axis=-1)
    w1 = 0.5 + jax.random.uniform(k2, (C1,), jnp.float32)   # TopBetaCoverage.torch_w
    beta1, scale1 = 0.9, 0.0                                 # module init: _scale = 0.0

    est1, res1 = class_risk_regressor_forward(P1, w1, beta1, scale1)
    jax.block_until_ready((est1, res1))
    e1, r1 = _reference_forward(P1, w1, jnp.float32(beta1), jnp.float32(scale1))
    np.testing.assert_allclose(np.asarray(est1), np.asarray(e1), rtol=1e-5, atol=1e-6)
    np.testing.assert_allclose(np.asarray(res1), np.asarray(r1), rtol=1e-5, atol=1e-6)

    # --- Test 2: C=156 exercises class padding (Cp=160), the unrolled 2-chunk
    #     pairwise compare, and a nonzero scale exercises the clamp. ----------
    B2, C2 = 64, 156
    P2 = jax.nn.softmax(jax.random.normal(k3, (B2, C2), jnp.float32), axis=-1)
    w2v = 0.5 + jax.random.uniform(k4, (C2,), jnp.float32)
    beta2, scale2 = 0.8, 0.5

    est2, res2 = class_risk_regressor_forward(P2, w2v, beta2, scale2,
                                              vmem_budget=32 * 1024 * 1024)
    jax.block_until_ready((est2, res2))
    e2, r2 = _reference_forward(P2, w2v, jnp.float32(beta2), jnp.float32(scale2))
    np.testing.assert_allclose(np.asarray(est2), np.asarray(e2), rtol=1e-5, atol=1e-6)
    np.testing.assert_allclose(np.asarray(res2), np.asarray(r2), rtol=1e-5, atol=1e-6)

    # --- Test 3: same data, tiny VMEM budget -> many chunks -> fori_loop path.
    est3, res3 = class_risk_regressor_forward(P2, w2v, beta2, scale2,
                                              vmem_budget=1 * 1024 * 1024)
    jax.block_until_ready((est3, res3))
    np.testing.assert_allclose(np.asarray(est3), np.asarray(e2), rtol=1e-5, atol=1e-6)
    np.testing.assert_allclose(np.asarray(res3), np.asarray(r2), rtol=1e-5, atol=1e-6)

    print("KERNEL_OK")
</pallas_src>

<mosaic_0001>
module attributes {stable_mosaic.version = 11 : i64} {
  func.func @_class_risk_kernel(%arg0: i32, %arg1: memref<1xf32, #tpu.memory_space<smem>>, %arg2: memref<1xf32, #tpu.memory_space<smem>>, %arg3: memref<16x128xf32, #tpu.memory_space<vmem>>, %arg4: memref<16x1xf32, #tpu.memory_space<vmem>>, %arg5: memref<2x128xf32, #tpu.memory_space<vmem>>) attributes {dimension_semantics = [#tpu.dimension_semantics<parallel>], iteration_bounds = array<i64: 2>, scalar_prefetch = 0 : i64, scratch_operands = 0 : i64, tpu.core_type = #tpu.core_type<tc>, window_params = [{transform_indices = @transform_0, window_bounds = array<i64: 1>}, {transform_indices = @transform_1, window_bounds = array<i64: 1>}, {transform_indices = @transform_2, window_bounds = array<i64: 16, 128>}, {pipeline_mode = #tpu.pipeline_mode<synchronous>, transform_indices = @transform_3, window_bounds = array<i64: 16, 1>}, {transform_indices = @transform_4, window_bounds = array<i64: 2, 128>}]} {
    %c0 = arith.constant 0 : index
    %0 = memref.load %arg1[%c0] : memref<1xf32, #tpu.memory_space<smem>>
    %c0_0 = arith.constant 0 : index
    %1 = memref.load %arg2[%c0_0] : memref<1xf32, #tpu.memory_space<smem>>
    %c0_1 = arith.constant 0 : index
    %c0_2 = arith.constant 0 : index
    %2 = vector.load %arg3[%c0_1, %c0_2] : memref<16x128xf32, #tpu.memory_space<vmem>>, vector<16x128xf32>
    %3 = vector.shape_cast %2 : vector<16x128xf32> to vector<1x16x128xf32>
    %4 = vector.shape_cast %2 : vector<16x128xf32> to vector<16x1x128xf32>
    %5 = vector.broadcast %4 : vector<16x1x128xf32> to vector<16x16x128xf32>
    %6 = vector.broadcast %3 : vector<1x16x128xf32> to vector<16x16x128xf32>
    %7 = arith.cmpf ogt, %5, %6 : vector<16x16x128xf32>
    %cst = arith.constant 0.000000e+00 : f32
    %8 = vector.shape_cast %4 : vector<16x1x128xf32> to vector<16x1x128xf32>
    %9 = vector.broadcast %8 : vector<16x1x128xf32> to vector<16x16x128xf32>
    %10 = vector.broadcast %cst : f32 to vector<16x16x128xf32>
    %11 = arith.select %7, %9, %10 : vector<16x16x128xi1>, vector<16x16x128xf32>
    %cst_3 = arith.constant dense<0.000000e+00> : vector<16x128xf32>
    %12 = vector.multi_reduction <add>, %11, %cst_3 [0] : vector<16x16x128xf32> to vector<16x128xf32>
    %13 = vector.broadcast %0 : f32 to vector<16x128xf32>
    %14 = arith.cmpf oge, %12, %13 : vector<16x128xf32>
    %c0_4 = arith.constant 0 : index
    %c0_5 = arith.constant 0 : index
    %15 = vector.load %arg4[%c0_4, %c0_5] : memref<16x1xf32, #tpu.memory_space<vmem>>, vector<16x1xf32>
    %16 = vector.broadcast %15 : vector<16x1xf32> to vector<16x128xf32>
    %17 = arith.mulf %2, %16 : vector<16x128xf32>
    %cst_6 = arith.constant 0.000000e+00 : f32
    %18 = vector.broadcast %cst_6 : f32 to vector<16x128xf32>
    %19 = arith.select %14, %17, %18 : vector<16x128xi1>, vector<16x128xf32>
    %cst_7 = arith.constant dense<0.000000e+00> : vector<128xf32>
    %20 = vector.multi_reduction <add>, %19, %cst_7 [0] : vector<16x128xf32> to vector<128xf32>
    %21 = vector.shape_cast %20 : vector<128xf32> to vector<1x128xf32>
    %22 = math.sqrt %21 : vector<1x128xf32>
    %23 = vector.broadcast %1 : f32 to vector<1x128xf32>
    %24 = arith.mulf %22, %23 : vector<1x128xf32>
    %cst_8 = arith.constant 0.000000e+00 : f32
    %cst_9 = arith.constant 1.000000e+00 : f32
    %25 = vector.broadcast %cst_8 : f32 to vector<1x128xf32>
    %26 = arith.maximumf %25, %24 : vector<1x128xf32>
    %27 = vector.broadcast %cst_9 : f32 to vector<1x128xf32>
    %28 = arith.minimumf %27, %26 : vector<1x128xf32>
    %29 = tpu.concatenate %22, %28 in 0 : vector<1x128xf32>, vector<1x128xf32> -> vector<2x128xf32>
    %c0_10 = arith.constant 0 : index
    %c0_11 = arith.constant 0 : index
    %30 = vector.load %arg5[%c0_10, %c0_11] : memref<2x128xf32, #tpu.memory_space<vmem>>, vector<2x128xf32>
    tpu.vector_store %arg5[%c0_10, %c0_11], %29 {strides = array<i32>} : memref<2x128xf32, #tpu.memory_space<vmem>>, vector<2x128xf32>,
    return
  }
  func.func @transform_0(%arg0: i32) -> i32 {
    %c0_i32 = arith.constant 0 : i32
    %c0_i32_0 = arith.constant 0 : i32
    return %c0_i32 : i32
  }
  func.func @transform_1(%arg0: i32) -> i32 {
    %c0_i32 = arith.constant 0 : i32
    %c0_i32_0 = arith.constant 0 : i32
    return %c0_i32 : i32
  }
  func.func @transform_2(%arg0: i32) -> (i32, i32) {
    %c0_i32 = arith.constant 0 : i32
    %c0_i32_0 = arith.constant 0 : i32
    return %c0_i32, %arg0 : i32, i32
  }
  func.func @transform_3(%arg0: i32) -> (i32, i32) {
    %c0_i32 = arith.constant 0 : i32
    %c0_i32_0 = arith.constant 0 : i32
    %c0_i32_1 = arith.constant 0 : i32
    return %c0_i32, %c0_i32_0 : i32, i32
  }
  func.func @transform_4(%arg0: i32) -> (i32, i32) {
    %c0_i32 = arith.constant 0 : i32
    %c0_i32_0 = arith.constant 0 : i32
    return %c0_i32, %arg0 : i32, i32
  }
}

</mosaic_0001>

<llo_original>
// kernel: tpu_custom_call.1
$region0: #{tpu_custom_call.1}
  #allocation0 [shape = 'u32[]', space=smem, size = 0x4, offset = 0x4, fixed_abs, tag = 'smem constant byte address 0x4 - core index']
  #allocation1 [shape = 'u32[144,128]{1,0:T(1,128)}', space=vmem, size = 0x12000, scoped, tag = 'internal scratch']
  #allocation2 [shape = 'f32[1]{0:T(128)S(6)}', space=smem, size = 0x200, scoped, tag = 'scoped memory for tpu_custom_call.1']
  #allocation3 [shape = 'f32[1]{0:T(128)S(6)}', space=smem, size = 0x200, scoped, tag = 'scoped memory for tpu_custom_call.1']
  %s0 = inlined_call_operand.<no memory space> [shape: f32[1], index: 0, kind: input, shape index: {}]
  %s1 = inlined_call_operand.<no memory space> [shape: f32[1], index: 1, kind: input, shape index: {}]
  %s2 = inlined_call_operand.hbm [shape: f32[16,256], index: 2, kind: input, shape index: {}]
  %s3 = inlined_call_operand.vmem [shape: f32[16,1], index: 3, kind: input, shape index: {}]
  %s4 = inlined_call_operand.hbm [shape: f32[2,256], index: 4, kind: output, shape index: {}]
  %s5 = sld [smem:[#allocation0]]
  $region53: #{tpu_custom_call.1} parent=0
    _
  %s7 = ssub.s32 1, %s5
  %s8 = scalar_select 0, %s7, %s5
  %9 = sst [smem:[#allocation2]] %s0
  %10 = sst [smem:[#allocation3]] %s1
  $region1: #{tpu_custom_call.1} parent=0
    #allocation4 [shape = 'u8[16384]{0}', space=vmem, size = 0x4000, scoped, tag = 'input window, operand 2']
    #allocation5 [shape = 's32[2]{0}', space=sflag, size = 0x8, scoped, tag = 'scoped memory for tpu_custom_call.1']
    #allocation6 [shape = 's32[2]{0}', space=sflag, size = 0x8, scoped, tag = 'scoped memory for tpu_custom_call.1']
    #allocation7 [shape = 'u8[2048]{0}', space=vmem, size = 0x800, scoped, tag = 'output window, operand 0']
    %11 = vsyncpa [#allocation5], 0
    %s12 = scalar_lea.sflag [#allocation5], 1
    %13 = vsyncpa %s12, 0
    %14 = vsyncpa [#allocation6], 0
    %s15 = scalar_lea.sflag [#allocation6], 1
    %16 = vsyncpa %s15, 0
    loop: start=0, step=1, limit=4
    $region2: #{tpu_custom_call.1} parent=1 // loop_pre_header
      _
    $region3: #{tpu_custom_call.1} parent=1 // loop_header
      %s18 = sphi 0, %s22
      %p19 = scmp.ge.s32.totalorder %s18, 4
      %s26 = sphi 0, %s26
      %s28 = sphi 0, %s26
      %s29 = sphi 0, %s28
      %s43 = sphi 0, %s29
      %s47 = sphi 0, %s47
      %s49 = sphi 0, %s47
      %s50 = sphi 0, %s49
      %s64 = sphi 0, %s50
      %s70 = sphi 0, %s72
      %s73 = sphi 0, %s70
      %s74 = sphi 0, %s73
      %s90 = sphi 0, %s74
      %s94 = sphi 0, %s94
      %s96 = sphi 0, %s94
      %s97 = sphi 0, %s96
      %s111 = sphi 0, %s97
      %s117 = sphi 0, %s119
      %s120 = sphi 0, %s117
      %s121 = sphi 0, %s120
      %s137 = sphi 0, %s121
    $region4: #{tpu_custom_call.1} parent=1 // loop_header_branch
      %21 = sbr.rel (%p19) target = $region8
    $region5: #{tpu_custom_call.1} parent=1 // loop_body
      %s23 = ssub.s32 %s18, 1
      %s24 = ssub.s32 %s18, 2
      %s25 = sadd.s32 %s18, 1
      %s27 = sadd.s32 %s26, 1
      %p30 = scmp.eq.s32.totalorder %s18, 1
      %p31 = scmp.ne.s32.totalorder %s26, %s28
      %p32 = scmp.eq.s32.totalorder %s18, 0
      %p33 = por %p31, %p32
      %p34 = scmp.ne.s32.totalorder %s26, %s28
      %p35 = scmp.eq.s32.totalorder %s23, 1
      %p36 = por %p34, %p35
      %p37 = scmp.ne.s32.totalorder %s28, %s29
      %p38 = scmp.eq.s32.totalorder %s23, 0
      %p39 = por %p37, %p38
      %p40 = scmp.ne.s32.totalorder %s28, %s29
      %p41 = scmp.eq.s32.totalorder %s24, 1
      %p42 = por %p40, %p41
      %p44 = scmp.ne.s32.totalorder %s29, %s43
      %p45 = scmp.eq.s32.totalorder %s24, 0
      %p46 = por %p44, %p45
      %s48 = sadd.s32 %s47, 1
      %p51 = scmp.eq.s32.totalorder %s18, 1
      %p52 = scmp.ne.s32.totalorder %s47, %s49
      %p53 = scmp.eq.s32.totalorder %s18, 0
      %p54 = por %p52, %p53
      %p55 = scmp.ne.s32.totalorder %s47, %s49
      %p56 = scmp.eq.s32.totalorder %s23, 1
      %p57 = por %p55, %p56
      %p58 = scmp.ne.s32.totalorder %s49, %s50
      %p59 = scmp.eq.s32.totalorder %s23, 0
      %p60 = por %p58, %p59
      %p61 = scmp.ne.s32.totalorder %s49, %s50
      %p62 = scmp.eq.s32.totalorder %s24, 1
      %p63 = por %p61, %p62
      %p65 = scmp.ne.s32.totalorder %s50, %s64
      %p66 = scmp.eq.s32.totalorder %s24, 0
      %p67 = por %p65, %p66
      %s68 = ssub.s32 %s18, %s25
      %p69 = scmp.eq.s32.totalorder %s68, 0
      %s71 = sadd.s32 %s70, 1
      %s72 = scalar_select %p69, %s70, %s71
      %p75 = pneg %p69
      %p76 = scmp.eq.s32.totalorder %s18, 1
      %p77 = por %p75, %p76
      %p78 = scmp.ne.s32.totalorder %s70, %s73
      %p79 = scmp.eq.s32.totalorder %s18, 0
      %p80 = por %p78, %p79
      %p81 = scmp.ne.s32.totalorder %s70, %s73
      %p82 = scmp.eq.s32.totalorder %s23, 1
      %p83 = por %p81, %p82
      %p84 = scmp.ne.s32.totalorder %s73, %s74
      %p85 = scmp.eq.s32.totalorder %s23, 0
      %p86 = por %p84, %p85
      %p87 = scmp.ne.s32.totalorder %s73, %s74
      %p88 = scmp.eq.s32.totalorder %s24, 1
      %p89 = por %p87, %p88
      %p91 = scmp.ne.s32.totalorder %s74, %s90
      %p92 = scmp.eq.s32.totalorder %s24, 0
      %p93 = por %p91, %p92
      %s95 = sadd.s32 %s94, 1
      %p98 = scmp.eq.s32.totalorder %s18, 1
      %p99 = scmp.ne.s32.totalorder %s94, %s96
      %p100 = scmp.eq.s32.totalorder %s18, 0
      %p101 = por %p99, %p100
      %p102 = scmp.ne.s32.totalorder %s94, %s96
      %p103 = scmp.eq.s32.totalorder %s23, 1
      %p104 = por %p102, %p103
      %p105 = scmp.ne.s32.totalorder %s96, %s97
      %p106 = scmp.eq.s32.totalorder %s23, 0
      %p107 = por %p105, %p106
      %p108 = scmp.ne.s32.totalorder %s96, %s97
      %p109 = scmp.eq.s32.totalorder %s24, 1
      %p110 = por %p108, %p109
      %p112 = scmp.ne.s32.totalorder %s97, %s111
      %p113 = scmp.eq.s32.totalorder %s24, 0
      %p114 = por %p112, %p113
      %s115 = ssub.s32 %s18, %s25
      %p116 = scmp.eq.s32.totalorder %s115, 0
      %s118 = sadd.s32 %s117, 1
      %s119 = scalar_select %p116, %s117, %s118
      %p122 = pneg %p116
      %p123 = scmp.eq.s32.totalorder %s18, 1
      %p124 = por %p122, %p123
      %p125 = scmp.ne.s32.totalorder %s117, %s120
      %p126 = scmp.eq.s32.totalorder %s18, 0
      %p127 = por %p125, %p126
      %p128 = scmp.ne.s32.totalorder %s117, %s120
      %p129 = scmp.eq.s32.totalorder %s23, 1
      %p130 = por %p128, %p129
      %p131 = scmp.ne.s32.totalorder %s120, %s121
      %p132 = scmp.eq.s32.totalorder %s23, 0
      %p133 = por %p131, %p132
      %p134 = scmp.ne.s32.totalorder %s120, %s121
      %p135 = scmp.eq.s32.totalorder %s24, 1
      %p136 = por %p134, %p135
      %p138 = scmp.ne.s32.totalorder %s121, %s137
      %p139 = scmp.eq.s32.totalorder %s24, 0
      %p140 = por %p138, %p139
      %p141 = scmp.le.s32.totalorder 1, %s18
      %p142 = scmp.lt.s32.totalorder %s18, 3
      %p143 = pnand %p141, %p142
      %p144 = pneg %p143
      // Predicated region
      $region9: #{tpu_custom_call.1} parent=5 // pred_check
        _
      $region10: #{tpu_custom_call.1} parent=5 // pred_check_branch
        %146 = sbr.rel (%p143) target = $region12
      $region11: #{tpu_custom_call.1} parent=5 // pred_region
        %s147 = ssub.s32 %s18, 1
        // Predicated region
        $region13: #{tpu_custom_call.1} parent=11 // pred_check
          %p148 = pneg %p39
        $region14: #{tpu_custom_call.1} parent=11 // pred_check_branch
          %150 = sbr.rel (%p148) target = $region16
        $region15: #{tpu_custom_call.1} parent=11 // pred_region
          _
        $region16: #{tpu_custom_call.1} parent=11 // pred_fallthru
          _
        // Predicated region
        $region17: #{tpu_custom_call.1} parent=11 // pred_check
          %p151 = pneg %p60
        $region18: #{tpu_custom_call.1} parent=11 // pred_check_branch
          %153 = sbr.rel (%p151) target = $region20
        $region19: #{tpu_custom_call.1} parent=11 // pred_region
          _
        $region20: #{tpu_custom_call.1} parent=11 // pred_fallthru
          _
        // Predicated region
        $region21: #{tpu_custom_call.1} parent=11 // pred_check
          %p154 = pneg %p107
        $region22: #{tpu_custom_call.1} parent=11 // pred_check_branch
          %156 = sbr.rel (%p154) target = $region24
        $region23: #{tpu_custom_call.1} parent=11 // pred_region
          _
        $region24: #{tpu_custom_call.1} parent=11 // pred_fallthru
          _
      $region12: #{tpu_custom_call.1} parent=5 // pred_fallthru
        _
      %p157 = scmp.lt.s32.totalorder %s18, 2
      // Predicated region
      $region25: #{tpu_custom_call.1} parent=5 // pred_check
        %p158 = pneg %p157
      $region26: #{tpu_custom_call.1} parent=5 // pred_check_branch
        %160 = sbr.rel (%p158) target = $region28
      $region27: #{tpu_custom_call.1} parent=5 // pred_region
        // Predicated region
        $region29: #{tpu_custom_call.1} parent=27 // pred_check
          %p161 = pneg %p80
        $region30: #{tpu_custom_call.1} parent=27 // pred_check_branch
          %163 = sbr.rel (%p161) target = $region32
        $region31: #{tpu_custom_call.1} parent=27 // pred_region
          %s164 = sand.u32 %s70, 1
          %s165 = scalar_lea.sflag [#allocation5], %s164
          %s166 = sand.u32 %s70, 1
          %s167 = smul.addr %s166, 16
          %s168 = scalar_lea.vmem [#allocation4], %s167
          %s170 = ssub.s32 256, 256
          %171 = vsyncadd %s165, %s170
          %s172 = smul.addr %s18, 128
          %s173 = scalar_lea.hbm %s2, %s172
          %s174 = sshll.u32 %s168, 4
          %s175 = int_to_ptr.vmem [resolvable:$true] %s174
          %180 = dma.hbm_to_vmem [thread:$0]  %s173, 256, %s175, %s165, 256, 128, 8
        $region32: #{tpu_custom_call.1} parent=27 // pred_fallthru
          _
      $region28: #{tpu_custom_call.1} parent=5 // pred_fallthru
        _
      %p181 = scmp.le.s32.totalorder 1, %s18
      %p182 = scmp.lt.s32.totalorder %s18, 3
      %p183 = pnand %p181, %p182
      %p184 = pneg %p183
      // Predicated region
      $region33: #{tpu_custom_call.1} parent=5 // pred_check
        _
      $region34: #{tpu_custom_call.1} parent=5 // pred_check_branch
        %186 = sbr.rel (%p183) target = $region36
      $region35: #{tpu_custom_call.1} parent=5 // pred_region
        %s187 = ssub.s32 %s18, 1
        %s188 = sand.u32 %s73, 1
        %s189 = scalar_lea.sflag [#allocation5], %s188
        %s190 = sand.u32 %s73, 1
        %s191 = smul.addr %s190, 16
        %s192 = scalar_lea.vmem [#allocation4], %s191
        // Predicated region
        $region37: #{tpu_custom_call.1} parent=35 // pred_check
          %p193 = pneg %p86
        $region38: #{tpu_custom_call.1} parent=35 // pred_check_branch
          %195 = sbr.rel (%p193) target = $region40
        $region39: #{tpu_custom_call.1} parent=35 // pred_region
          %196 = dma.done %s189, 256
        $region40: #{tpu_custom_call.1} parent=35 // pred_fallthru
          _
        %p197 = pneg %p39
        %p198 = pneg %p36
        %p199 = pneg %p60
        %p200 = pneg %p57
        %s201 = sand.u32 %s73, 1
        %s202 = scalar_lea.sflag [#allocation5], %s201
        %s203 = sand.u32 %s73, 1
        %s204 = smul.addr %s203, 16
        %s205 = scalar_lea.vmem [#allocation4], %s204
        %p206 = pneg %p86
        %p207 = pneg %p83
        %p208 = pneg %p107
        %p209 = pneg %p104
        %p210 = pneg %p133
        %p211 = pneg %p130
        %s212 = sand.u32 %s120, 1
        %s213 = scalar_lea.sflag [#allocation6], %s212
        %s214 = sand.u32 %s120, 1
        %s215 = smul.addr %s214, 2
        %s216 = scalar_lea.vmem [#allocation7], %s215
        %s217 = sld [smem:[#allocation2]]
        %s218 = sld [smem:[#allocation3]]
        %v219 = vld [vmem:[%s192] sm:$0xff]
        %v220 = vld [vmem:[%s192 + $0x8] sm:$0xff]
        %v223 = vcombine.high %v219, %v219
        %v225 = vunpack.c.l.s4 1966171168
        %v226 = vunpack.c.0.s8 %v225
        %v227 = vlaneseq
        %v228 = vshrl.u32 %v227, 7
        %v229 = vsub.s32 %v226, %v228
        %v230 = vrot.slane %v219, %v229
        %v232 = vunpack.c.l.s4 1966171168
        %v233 = vunpack.c.0.s8 %v232
        %v234 = vlaneseq
        %v235 = vshrl.u32 %v234, 7
        %v236 = vsub.s32 %v233, %v235
        %v237 = vrot.slane %v223, %v236
        %v238 = vcombine.high %v230, %v230
        %v239 = vcombine.high %v237, %v237
        %v241 = vunpack.c.l.s4 1966171168
        %v242 = vunpack.c.0.s8 %v241
        %v243 = vlaneseq
        %v244 = vshrl.u32 %v243, 7
        %v245 = vsub.s32 %v242, %v244
        %v246 = vrot.slane %v230, %v245
        %v248 = vunpack.c.l.s4 1966171168
        %v249 = vunpack.c.0.s8 %v248
        %v250 = vlaneseq
        %v251 = vshrl.u32 %v250, 7
        %v252 = vsub.s32 %v249, %v251
        %v253 = vrot.slane %v237, %v252
        %v255 = vunpack.c.l.s4 1966171168
        %v256 = vunpack.c.0.s8 %v255
        %v257 = vlaneseq
        %v258 = vshrl.u32 %v257, 7
        %v259 = vsub.s32 %v256, %v258
        %v260 = vrot.slane %v238, %v259
        %v262 = vunpack.c.l.s4 1966171168
        %v263 = vunpack.c.0.s8 %v262
        %v264 = vlaneseq
        %v265 = vshrl.u32 %v264, 7
        %v266 = vsub.s32 %v263, %v265
        %v267 = vrot.slane %v239, %v266
        %v268 = vcombine.high %v246, %v246
        %v269 = vcombine.high %v253, %v253
        %v270 = vcombine.high %v260, %v260
        %v271 = vcombine.high %v267, %v267
        %v272 = vcombine.high %v220, %v220
        %v274 = vunpack.c.l.s4 1966171168
        %v275 = vunpack.c.0.s8 %v274
        %v276 = vlaneseq
        %v277 = vshrl.u32 %v276, 7
        %v278 = vsub.s32 %v275, %v277
        %v279 = vrot.slane %v220, %v278
        %v281 = vunpack.c.l.s4 1966171168
        %v282 = vunpack.c.0.s8 %v281
        %v283 = vlaneseq
        %v284 = vshrl.u32 %v283, 7
        %v285 = vsub.s32 %v282, %v284
        %v286 = vrot.slane %v272, %v285
        %v287 = vcombine.high %v279, %v279
        %v288 = vcombine.high %v286, %v286
        %v290 = vunpack.c.l.s4 1966171168
        %v291 = vunpack.c.0.s8 %v290
        %v292 = vlaneseq
        %v293 = vshrl.u32 %v292, 7
        %v294 = vsub.s32 %v291, %v293
        %v295 = vrot.slane %v279, %v294
        %v297 = vunpack.c.l.s4 1966171168
        %v298 = vunpack.c.0.s8 %v297
        %v299 = vlaneseq
        %v300 = vshrl.u32 %v299, 7
        %v301 = vsub.s32 %v298, %v300
        %v302 = vrot.slane %v286, %v301
        %v304 = vunpack.c.l.s4 1966171168
        %v305 = vunpack.c.0.s8 %v304
        %v306 = vlaneseq
        %v307 = vshrl.u32 %v306, 7
        %v308 = vsub.s32 %v305, %v307
        %v309 = vrot.slane %v287, %v308
        %v311 = vunpack.c.l.s4 1966171168
        %v312 = vunpack.c.0.s8 %v311
        %v313 = vlaneseq
        %v314 = vshrl.u32 %v313, 7
        %v315 = vsub.s32 %v312, %v314
        %v316 = vrot.slane %v288, %v315
        %v317 = vcombine.high %v295, %v295
        %v318 = vcombine.high %v302, %v302
        %v319 = vcombine.high %v309, %v309
        %v320 = vcombine.high %v316, %v316
        %v321 = vlaneseq
        %v322 = vshrl.u32 %v321, 7
        %v323 = vsub.s32 0, %v322
        %v324 = vrot.slane %v246, %v323
        %v325 = vlaneseq
        %v326 = vshrl.u32 %v325, 7
        %v327 = vsub.s32 0, %v326
        %v328 = vrot.slane %v260, %v327
        %v329 = vlaneseq
        %v330 = vshrl.u32 %v329, 7
        %v331 = vsub.s32 0, %v330
        %v332 = vrot.slane %v268, %v331
        %v333 = vlaneseq
        %v334 = vshrl.u32 %v333, 7
        %v335 = vsub.s32 0, %v334
        %v336 = vrot.slane %v270, %v335
        %v337 = vlaneseq
        %v338 = vshrl.u32 %v337, 7
        %v339 = vsub.s32 0, %v338
        %v340 = vrot.slane %v253, %v339
        %v341 = vlaneseq
        %v342 = vshrl.u32 %v341, 7
        %v343 = vsub.s32 0, %v342
        %v344 = vrot.slane %v267, %v343
        %v345 = vlaneseq
        %v346 = vshrl.u32 %v345, 7
        %v347 = vsub.s32 0, %v346
        %v348 = vrot.slane %v269, %v347
        %v349 = vlaneseq
        %v350 = vshrl.u32 %v349, 7
        %v351 = vsub.s32 0, %v350
        %v352 = vrot.slane %v271, %v351
        %v353 = vlaneseq
        %v354 = vshrl.u32 %v353, 7
        %v355 = vsub.s32 0, %v354
        %v356 = vrot.slane %v295, %v355
        %v357 = vlaneseq
        %v358 = vshrl.u32 %v357, 7
        %v359 = vsub.s32 0, %v358
        %v360 = vrot.slane %v309, %v359
        %v361 = vlaneseq
        %v362 = vshrl.u32 %v361, 7
        %v363 = vsub.s32 0, %v362
        %v364 = vrot.slane %v317, %v363
        %v365 = vlaneseq
        %v366 = vshrl.u32 %v365, 7
        %v367 = vsub.s32 0, %v366
        %v368 = vrot.slane %v319, %v367
        %v369 = vlaneseq
        %v370 = vshrl.u32 %v369, 7
        %v371 = vsub.s32 0, %v370
        %v372 = vrot.slane %v302, %v371
        %v373 = vlaneseq
        %v374 = vshrl.u32 %v373, 7
        %v375 = vsub.s32 0, %v374
        %v376 = vrot.slane %v316, %v375
        %v377 = vlaneseq
        %v378 = vshrl.u32 %v377, 7
        %v379 = vsub.s32 0, %v378
        %v380 = vrot.slane %v318, %v379
        %v381 = vlaneseq
        %v382 = vshrl.u32 %v381, 7
        %v383 = vsub.s32 0, %v382
        %v384 = vrot.slane %v320, %v383
        %vm401 = vcmp.gt.f32.partialorder %v324, %v219
        %vm402 = vcmp.gt.f32.partialorder %v324, %v220
        %vm403 = vcmp.gt.f32.partialorder %v328, %v219
        %vm404 = vcmp.gt.f32.partialorder %v328, %v220
        %vm405 = vcmp.gt.f32.partialorder %v332, %v219
        %vm406 = vcmp.gt.f32.partialorder %v332, %v220
        %vm407 = vcmp.gt.f32.partialorder %v336, %v219
        %vm408 = vcmp.gt.f32.partialorder %v336, %v220
        %vm409 = vcmp.gt.f32.partialorder %v340, %v219
        %vm410 = vcmp.gt.f32.partialorder %v340, %v220
        %vm411 = vcmp.gt.f32.partialorder %v344, %v219
        %vm412 = vcmp.gt.f32.partialorder %v344, %v220
        %vm413 = vcmp.gt.f32.partialorder %v348, %v219
        %vm414 = vcmp.gt.f32.partialorder %v348, %v220
        %vm415 = vcmp.gt.f32.partialorder %v352, %v219
        %vm416 = vcmp.gt.f32.partialorder %v352, %v220
        %vm417 = vcmp.gt.f32.partialorder %v356, %v219
        %vm418 = vcmp.gt.f32.partialorder %v356, %v220
        %vm419 = vcmp.gt.f32.partialorder %v360, %v219
        %vm420 = vcmp.gt.f32.partialorder %v360, %v220
        %vm421 = vcmp.gt.f32.partialorder %v364, %v219
        %vm422 = vcmp.gt.f32.partialorder %v364, %v220
        %vm423 = vcmp.gt.f32.partialorder %v368, %v219
        %vm424 = vcmp.gt.f32.partialorder %v368, %v220
        %vm425 = vcmp.gt.f32.partialorder %v372, %v219
        %vm426 = vcmp.gt.f32.partialorder %v372, %v220
        %vm427 = vcmp.gt.f32.partialorder %v376, %v219
        %vm428 = vcmp.gt.f32.partialorder %v376, %v220
        %vm429 = vcmp.gt.f32.partialorder %v380, %v219
        %vm430 = vcmp.gt.f32.partialorder %v380, %v220
        %vm431 = vcmp.gt.f32.partialorder %v384, %v219
        %vm432 = vcmp.gt.f32.partialorder %v384, %v220
        %v433 = vsel %vm401, %v324, 0.0
        %v434 = vsel %vm402, %v324, 0.0
        %v435 = vsel %vm403, %v328, 0.0
        %v436 = vsel %vm404, %v328, 0.0
        %v437 = vsel %vm405, %v332, 0.0
        %v438 = vsel %vm406, %v332, 0.0
        %v439 = vsel %vm407, %v336, 0.0
        %v440 = vsel %vm408, %v336, 0.0
        %v441 = vsel %vm409, %v340, 0.0
        %v442 = vsel %vm410, %v340, 0.0
        %v443 = vsel %vm411, %v344, 0.0
        %v444 = vsel %vm412, %v344, 0.0
        %v445 = vsel %vm413, %v348, 0.0
        %v446 = vsel %vm414, %v348, 0.0
        %v447 = vsel %vm415, %v352, 0.0
        %v448 = vsel %vm416, %v352, 0.0
        %v449 = vsel %vm417, %v356, 0.0
        %v450 = vsel %vm418, %v356, 0.0
        %v451 = vsel %vm419, %v360, 0.0
        %v452 = vsel %vm420, %v360, 0.0
        %v453 = vsel %vm421, %v364, 0.0
        %v454 = vsel %vm422, %v364, 0.0
        %v455 = vsel %vm423, %v368, 0.0
        %v456 = vsel %vm424, %v368, 0.0
        %v457 = vsel %vm425, %v372, 0.0
        %v458 = vsel %vm426, %v372, 0.0
        %v459 = vsel %vm427, %v376, 0.0
        %v460 = vsel %vm428, %v376, 0.0
        %v461 = vsel %vm429, %v380, 0.0
        %v462 = vsel %vm430, %v380, 0.0
        %v463 = vsel %vm431, %v384, 0.0
        %v464 = vsel %vm432, %v384, 0.0
        %v465 = vadd.f32 %v433, %v435
        %v466 = vadd.f32 %v465, %v437
        %v467 = vadd.f32 %v466, %v439
        %v468 = vadd.f32 %v467, %v441
        %v469 = vadd.f32 %v468, %v443
        %v470 = vadd.f32 %v469, %v445
        %v471 = vadd.f32 %v470, %v447
        %v472 = vadd.f32 %v471, %v449
        %v473 = vadd.f32 %v472, %v451
        %v474 = vadd.f32 %v473, %v453
        %v475 = vadd.f32 %v474, %v455
        %v476 = vadd.f32 %v475, %v457
        %v477 = vadd.f32 %v476, %v459
        %v478 = vadd.f32 %v477, %v461
        %v479 = vadd.f32 %v478, %v463
        %v480 = vadd.f32 %v434, %v436
        %v481 = vadd.f32 %v480, %v438
        %v482 = vadd.f32 %v481, %v440
        %v483 = vadd.f32 %v482, %v442
        %v484 = vadd.f32 %v483, %v444
        %v485 = vadd.f32 %v484, %v446
        %v486 = vadd.f32 %v485, %v448
        %v487 = vadd.f32 %v486, %v450
        %v488 = vadd.f32 %v487, %v452
        %v489 = vadd.f32 %v488, %v454
        %v490 = vadd.f32 %v489, %v456
        %v491 = vadd.f32 %v490, %v458
        %v492 = vadd.f32 %v491, %v460
        %v493 = vadd.f32 %v492, %v462
        %v494 = vadd.f32 %v493, %v464
        %v495 = vstv %s217
        %vm496 = vcmp.ge.f32.partialorder %v479, %v495
        %vm497 = vcmp.ge.f32.partialorder %v494, %v495
        %v498 = vld [vmem:[%s3] sm:$0xff]
        %v499 = vld [vmem:[%s3 + $0x8] sm:$0xff]
        %501 = vset.pattern.permute.xlu0 0
        %502 = vperm.xlu0 %501, %v498
        %v503 = vpop.permute.xlu0 %502
        %506 = vset.pattern.permute.xlu0 0
        %507 = vperm.xlu0 %506, %v499
        %v508 = vpop.permute.xlu0 %507
        %v510 = vmul.f32 %v219, %v503
        %v511 = vmul.f32 %v220, %v508
        %v512 = vsel %vm496, %v510, 0.0
        %v513 = vsel %vm497, %v511, 0.0
        %v514 = vadd.f32 %v512, %v513
        %v515 = vrot.slane %v514, 4
        %v516 = vadd.f32 %v514, %v515
        %v517 = vrot.slane %v516, 2
        %v518 = vadd.f32 %v516, %v517
        %v519 = vrot.slane %v518, 1
        %v520 = vadd.f32 %v518, %v519
        %v521 = vrsqrt.pop %v520
        %v522 = vmul.f32 %v520, %v521
        %vm523 = vcmp.eq.f32.partialorder %v520, inf
        %v524 = vsel %vm523, %v520, %v522
        %vm525 = vcmp.eq.f32.partialorder %v520, 0.0
        %v526 = vand.u32 %v520, 2147483648
        %v527 = vsel %vm525, %v526, %v524
        %v528 = vstv %s218
        %v529 = vmul.f32 %v527, %v528
        %v530 = vmax.f32 %v529, 0.0
        %v531 = vmin.f32 %v530, 1.0
        %vm532 = vcmask 1040384
        %v533 = vsel %vm532, %v527, %v531
        %534 = vst [vmem:[%s216] sm:$0x3] %v533
        %s535 = sand.u32 %s120, 1
        %s536 = scalar_lea.sflag [#allocation6], %s535
        %s537 = sand.u32 %s120, 1
        %s538 = smul.addr %s537, 2
        %s539 = scalar_lea.vmem [#allocation7], %s538
        // Predicated region
        $region41: #{tpu_custom_call.1} parent=35 // pred_check
          %p540 = pneg %p130
        $region42: #{tpu_custom_call.1} parent=35 // pred_check_branch
          %542 = sbr.rel (%p540) target = $region44
        $region43: #{tpu_custom_call.1} parent=35 // pred_region
          %s544 = ssub.s32 32, 32
          %545 = vsyncadd %s536, %s544
          %s546 = smul.addr %s23, 32
          %s547 = scalar_lea.hbm %s4, %s546
          %s549 = sshll.u32 %s539, 4
          %s550 = int_to_ptr.vmem [resolvable:$true] %s549
          %552 = dma.vmem_to_hbm [thread:$0]  %s550, 32, %s547, %s536
        $region44: #{tpu_custom_call.1} parent=35 // pred_fallthru
          _
      $region36: #{tpu_custom_call.1} parent=5 // pred_fallthru
        _
      %p553 = scmp.le.s32.totalorder 2, %s18
      // Predicated region
      $region45: #{tpu_custom_call.1} parent=5 // pred_check
        %p554 = pneg %p553
      $region46: #{tpu_custom_call.1} parent=5 // pred_check_branch
        %556 = sbr.rel (%p554) target = $region48
      $region47: #{tpu_custom_call.1} parent=5 // pred_region
        %s557 = ssub.s32 %s18, 2
        // Predicated region
        $region49: #{tpu_custom_call.1} parent=47 // pred_check
          %p558 = pneg %p136
        $region50: #{tpu_custom_call.1} parent=47 // pred_check_branch
          %560 = sbr.rel (%p558) target = $region52
        $region51: #{tpu_custom_call.1} parent=47 // pred_region
          %s561 = sand.u32 %s121, 1
          %s562 = scalar_lea.sflag [#allocation6], %s561
          %s563 = sand.u32 %s121, 1
          %s564 = smul.addr %s563, 2
          %s565 = scalar_lea.vmem [#allocation7], %s564
          %566 = dma.done %s562, 32
        $region52: #{tpu_custom_call.1} parent=47 // pred_fallthru
          _
      $region48: #{tpu_custom_call.1} parent=5 // pred_fallthru
        _
    $region6: #{tpu_custom_call.1} parent=1 // loop_footer
      %s22 = sadd.s32 1, %s18
    $region7: #{tpu_custom_call.1} parent=1 // loop_footer_branch
      %17 = sbr.rel target = $region3
    $region8: #{tpu_custom_call.1} parent=1 // loop_exit
      _
    %567 = vsyncpa [#allocation5], 1
    %s568 = scalar_lea.sflag [#allocation5], 1
    %569 = vsyncpa %s568, 1
    %570 = vsyncpa [#allocation6], 1
    %s571 = scalar_lea.sflag [#allocation6], 1
    %572 = vsyncpa %s571, 1

</llo_original>
